<compile_context>
chip_gen: v7x
topology: tpu7x:2x2x1
jax: 0.10.0
libtpu: 0.0.40
codegen_flags: <defaults>
</compile_context>

<pallas_src>
import functools
import math

import jax
import jax.numpy as jnp
from jax.experimental import pallas as pl
from jax.experimental.pallas import tpu as pltpu

_VMEM_LIMIT = 64 * 1024 * 1024  # safe on v5e/v6e (128 MiB phys) and v7x (64 MiB)


# ----------------------------------------------------------------------------- helpers
def _round_up(n, m):
    return (n + m - 1) // m * m


def _pick_tile(n, candidates=(512, 256, 128)):
    for c in candidates:
        if n >= c and n % c == 0:
            return c
    return n


def _compiler_params(sem):
    return pltpu.CompilerParams(dimension_semantics=sem,
                                vmem_limit_bytes=_VMEM_LIMIT)


def _rmsnorm_f32(x_f32, g_f32, eps):
    # matches torch: weight * x / (x.norm(2, dim=-1, keepdim=True) + eps)
    norm = jnp.sqrt(jnp.sum(x_f32 * x_f32, axis=-1, keepdims=True))
    return (g_f32 * x_f32) / (norm + eps)


# ----------------------------------------------------------------------------- kernels
def _norm_qkv_kernel(x_ref, g_ref, w_ref, b_ref, o_ref, *, eps):
    # x_ref: (tm, C)  g_ref: (1, C)  w_ref: (C, tn)  b_ref: (1, tn)  o_ref: (tm, tn)
    xf = x_ref[...].astype(jnp.float32)
    xn = _rmsnorm_f32(xf, g_ref[...].astype(jnp.float32), eps)
    xn = xn.astype(w_ref.dtype)            # bf16 matmul when weights are bf16
    y = jnp.dot(xn, w_ref[...], preferred_element_type=jnp.float32)
    y = y + b_ref[...].astype(jnp.float32)
    o_ref[...] = y.astype(o_ref.dtype)


def _attn_core_kernel(q_ref, k_ref, v_ref, sin_ref, cos_ref, o_ref, *, scale):
    # one (batch, head): q/k/v: (T, hd), sin/cos: (T, hd//2)
    half = sin_ref.shape[-1]
    qf = q_ref[...].astype(jnp.float32)
    kf = k_ref[...].astype(jnp.float32)
    sin = sin_ref[...]
    cos = cos_ref[...]

    # Q/K arrive with per-head features already de-interleaved ([even | odd])
    # because the wrapper permuted the projection weight columns.
    qe, qo = qf[:, :half], qf[:, half:]
    ke, ko = kf[:, :half], kf[:, half:]
    q1 = (qe * cos - qo * sin).astype(q_ref.dtype)
    q2 = (qe * sin + qo * cos).astype(q_ref.dtype)
    k1 = (ke * cos - ko * sin).astype(k_ref.dtype)
    k2 = (ke * sin + ko * cos).astype(k_ref.dtype)

    nt = (((1,), (1,)), ((), ()))          # contract last dims: q @ k^T
    s = jax.lax.dot_general(q1, k1, nt, preferred_element_type=jnp.float32)
    s = s + jax.lax.dot_general(q2, k2, nt, preferred_element_type=jnp.float32)
    s = s * scale

    m = jnp.max(s, axis=-1, keepdims=True)
    e = jnp.exp(s - m)
    p = e / jnp.sum(e, axis=-1, keepdims=True)

    out = jnp.dot(p.astype(v_ref.dtype), v_ref[...],
                  preferred_element_type=jnp.float32)
    o_ref[...] = out.astype(o_ref.dtype)


def _outproj_residual_kernel(a_ref, x_ref, w_ref, b_ref, o_ref):
    # a_ref: (tm, C)  x_ref: (tm, tn)  w_ref: (C, tn)  b_ref: (1, tn)
    y = jnp.dot(a_ref[...], w_ref[...], preferred_element_type=jnp.float32)
    y = y + b_ref[...].astype(jnp.float32) + x_ref[...].astype(jnp.float32)
    o_ref[...] = y.astype(o_ref.dtype)


def _norm_swiglu_residual_kernel(h_ref, g_ref, w1p_ref, b1p_ref, w1g_ref,
                                 b1g_ref, w2_ref, b2_ref, o_ref,
                                 xn_ref, acc_ref, *, eps):
    # grid = (rows, hidden tiles); hidden axis is the reduction (P3 pattern).
    k = pl.program_id(1)

    @pl.when(k == 0)
    def _init():
        hf = h_ref[...].astype(jnp.float32)
        xn = _rmsnorm_f32(hf, g_ref[...].astype(jnp.float32), eps)
        xn_ref[...] = xn.astype(xn_ref.dtype)
        acc_ref[...] = jnp.zeros_like(acc_ref)

    xn = xn_ref[...]
    proj = jnp.dot(xn, w1p_ref[...], preferred_element_type=jnp.float32)
    proj = proj + b1p_ref[...].astype(jnp.float32)
    gate = jnp.dot(xn, w1g_ref[...], preferred_element_type=jnp.float32)
    gate = gate + b1g_ref[...].astype(jnp.float32)
    gated = (gate * jax.nn.sigmoid(gate)) * proj
    acc_ref[...] += jnp.dot(gated.astype(w2_ref.dtype), w2_ref[...],
                            preferred_element_type=jnp.float32)

    @pl.when(k == pl.num_programs(1) - 1)
    def _finalize():
        out = (h_ref[...].astype(jnp.float32) + acc_ref[...]
               + b2_ref[...].astype(jnp.float32))
        o_ref[...] = out.astype(o_ref.dtype)


# ----------------------------------------------------------------------------- wrapper
def transformer_block_pallas(x, params, *, n_heads, eps=1e-6,
                             compute_dtype=None, mask=None):
    """x: (B, T, C). params follow PyTorch nn.Linear conventions (see __main__)."""
    if mask is not None:
        # TODO(synk): optional attention mask not supported in the kernel path.
        raise NotImplementedError("mask is not supported by the Pallas kernel path")

    B, T, C = x.shape
    H = n_heads
    assert C % H == 0
    hd = C // H
    half = hd // 2
    assert hd % 2 == 0
    assert C % 128 == 0, "model dim must be a multiple of 128 (lane-dense)"

    cdt = jnp.dtype(compute_dtype) if compute_dtype is not None else x.dtype
    f32 = jnp.float32

    hidden = params["w2"].shape[1]
    assert params["w1"].shape[0] == 2 * hidden
    assert hidden % 128 == 0, "hidden dim must be a multiple of 128 (lane-dense)"

    # --- parameter prep (do once at load time in a real deployment) ---------
    wqkv = params["wqkv"].astype(cdt)
    bqkv = params["bqkv"].astype(cdt)
    wq, wk, wv = wqkv[:C], wqkv[C:2 * C], wqkv[2 * C:]
    bq, bk, bv = bqkv[:C], bqkv[C:2 * C], bqkv[2 * C:]

    # per-head even/odd de-interleave permutation folded into Wq/Wk columns so
    # the kernels never do a stride-2 lane gather (q and k get the same
    # permutation -> attention scores are unchanged).
    d_perm = jnp.concatenate([jnp.arange(0, hd, 2), jnp.arange(1, hd, 2)])
    perm = (jnp.arange(H)[:, None] * hd + d_perm[None, :]).reshape(-1)

    w_qkv_t = jnp.stack([wq.T[:, perm], wk.T[:, perm], wv.T], axis=0)      # (3, C, C)
    b_qkv = jnp.stack([bq[perm], bk[perm], bv], axis=0).reshape(3, 1, C)

    wo_t = params["wo"].astype(cdt).T
    bo = params["bo"].astype(cdt).reshape(1, C)

    w1 = params["w1"].astype(cdt)
    b1 = params["b1"].astype(cdt)
    w1p_t = w1[:hidden].T                  # proj = first half of chunk(2)
    w1g_t = w1[hidden:].T                  # gate = second half
    b1p = b1[:hidden].reshape(1, hidden)
    b1g = b1[hidden:].reshape(1, hidden)
    w2_t = params["w2"].astype(cdt).T
    b2 = params["b2"].astype(cdt).reshape(1, C)

    g1 = params["g1"].astype(f32).reshape(1, C)
    g2 = params["g2"].astype(f32).reshape(1, C)

    # rotary table, exactly as the PyTorch RotaryEmbedding / apply_rotary
    inv_freq = 1.0 / 10000.0 ** (jnp.arange(0, hd, 2, dtype=f32) / hd)
    t = jnp.arange(T, dtype=f32)
    freqs = t[:, None] * inv_freq[None, :]
    emb = jnp.concatenate([jnp.sin(freqs), jnp.cos(freqs)], axis=-1)       # (T, hd)
    sin_v = emb[:, ::2]
    cos_v = emb[:, 1::2]

    # --- tiling --------------------------------------------------------------
    x = x.astype(cdt)
    M = B * T
    tm = min(256, _round_up(M, 8))         # big row tile; many steps at real M
    M_pad = _round_up(M, tm)
    x2d = x.reshape(M, C)
    if M_pad != M:
        x2d = jnp.pad(x2d, ((0, M_pad - M), (0, 0)))

    tn = _pick_tile(C)                     # output-column tile (QKV / out-proj)
    th = _pick_tile(hidden)                # hidden tile (SwiGLU reduction)

    # --- kernel 1: RMSNorm(x) -> q/k/v projections ---------------------------
    qkv = pl.pallas_call(
        functools.partial(_norm_qkv_kernel, eps=eps),
        out_shape=jax.ShapeDtypeStruct((3, M_pad, C), cdt),
        grid_spec=pltpu.PrefetchScalarGridSpec(
            num_scalar_prefetch=0,
            grid=(M_pad // tm, 3, C // tn),
            in_specs=[
                pl.BlockSpec((tm, C), lambda i, j, n: (i, 0)),
                pl.BlockSpec((1, C), lambda i, j, n: (0, 0)),
                pl.BlockSpec((None, C, tn), lambda i, j, n: (j, 0, n)),
                pl.BlockSpec((None, 1, tn), lambda i, j, n: (j, 0, n)),
            ],
            out_specs=pl.BlockSpec((None, tm, tn), lambda i, j, n: (j, i, n)),
        ),
        compiler_params=_compiler_params(("parallel", "arbitrary", "arbitrary")),
    )(x2d, g1, w_qkv_t, b_qkv)

    def _split_heads(y2d):
        return (y2d[:M].reshape(B, T, H, hd).transpose(0, 2, 1, 3)
                .reshape(B * H, T, hd))

    qh = _split_heads(qkv[0])
    kh = _split_heads(qkv[1])
    vh = _split_heads(qkv[2])

    # --- kernel 2: per-(batch, head) RoPE + softmax attention ----------------
    attn = pl.pallas_call(
        functools.partial(_attn_core_kernel, scale=1.0 / math.sqrt(hd)),
        out_shape=jax.ShapeDtypeStruct((B * H, T, hd), cdt),
        grid_spec=pltpu.PrefetchScalarGridSpec(
            num_scalar_prefetch=0,
            grid=(B * H,),
            in_specs=[
                pl.BlockSpec((None, T, hd), lambda g: (g, 0, 0)),
                pl.BlockSpec((None, T, hd), lambda g: (g, 0, 0)),
                pl.BlockSpec((None, T, hd), lambda g: (g, 0, 0)),
                pl.BlockSpec((T, half), lambda g: (0, 0)),
                pl.BlockSpec((T, half), lambda g: (0, 0)),
            ],
            out_specs=pl.BlockSpec((None, T, hd), lambda g: (g, 0, 0)),
        ),
        compiler_params=_compiler_params(("parallel",)),
    )(qh, kh, vh, sin_v, cos_v)

    attn2d = attn.reshape(B, H, T, hd).transpose(0, 2, 1, 3).reshape(M, C)
    if M_pad != M:
        attn2d = jnp.pad(attn2d, ((0, M_pad - M), (0, 0)))

    # --- kernel 3: out-projection + residual ---------------------------------
    h1 = pl.pallas_call(
        _outproj_residual_kernel,
        out_shape=jax.ShapeDtypeStruct((M_pad, C), cdt),
        grid_spec=pltpu.PrefetchScalarGridSpec(
            num_scalar_prefetch=0,
            grid=(M_pad // tm, C // tn),
            in_specs=[
                pl.BlockSpec((tm, C), lambda i, n: (i, 0)),
                pl.BlockSpec((tm, tn), lambda i, n: (i, n)),
                pl.BlockSpec((C, tn), lambda i, n: (0, n)),
                pl.BlockSpec((1, tn), lambda i, n: (0, n)),
            ],
            out_specs=pl.BlockSpec((tm, tn), lambda i, n: (i, n)),
        ),
        compiler_params=_compiler_params(("parallel", "arbitrary")),
    )(attn2d, x2d, wo_t, bo)

    # --- kernel 4: RMSNorm -> SwiGLU (hidden-tiled, accumulated) + residual --
    itemsize = jnp.dtype(cdt).itemsize
    swiglu_cost = pl.CostEstimate(
        flops=int(6 * M_pad * C * hidden),
        transcendentals=int(M_pad * hidden),
        bytes_accessed=int((3 * C * hidden + 2 * M_pad * C) * itemsize),
    )

    out2d = pl.pallas_call(
        functools.partial(_norm_swiglu_residual_kernel, eps=eps),
        out_shape=jax.ShapeDtypeStruct((M_pad, C), cdt),
        grid_spec=pltpu.PrefetchScalarGridSpec(
            num_scalar_prefetch=0,
            grid=(M_pad // tm, hidden // th),
            in_specs=[
                pl.BlockSpec((tm, C), lambda i, k: (i, 0)),    # h1 (also residual)
                pl.BlockSpec((1, C), lambda i, k: (0, 0)),     # g2
                pl.BlockSpec((C, th), lambda i, k: (0, k)),    # W1_proj^T tile
                pl.BlockSpec((1, th), lambda i, k: (0, k)),    # b1_proj tile
                pl.BlockSpec((C, th), lambda i, k: (0, k)),    # W1_gate^T tile
                pl.BlockSpec((1, th), lambda i, k: (0, k)),    # b1_gate tile
                pl.BlockSpec((th, C), lambda i, k: (k, 0)),    # W2^T tile
                pl.BlockSpec((1, C), lambda i, k: (0, 0)),     # b2
            ],
            out_specs=pl.BlockSpec((tm, C), lambda i, k: (i, 0)),
            scratch_shapes=[
                pltpu.VMEM((tm, C), cdt),           # normalized activations
                pltpu.VMEM((tm, C), jnp.float32),   # f32 accumulator
            ],
        ),
        compiler_params=_compiler_params(("parallel", "arbitrary")),
        cost_estimate=swiglu_cost,
    )(h1, g2, w1p_t, b1p, w1g_t, b1g, w2_t, b2)

    return out2d[:M].reshape(B, T, C)


# ----------------------------------------------------------------------------- reference
def transformer_block_ref(x, params, *, n_heads, eps=1e-6):
    B, T, C = x.shape
    H = n_heads
    hd = C // H

    def rmsnorm(v, w):
        norm = jnp.sqrt(jnp.sum(v * v, axis=-1, keepdims=True))
        return w * v / (norm + eps)

    xn = rmsnorm(x, params["g1"])
    qkv = xn @ params["wqkv"].T + params["bqkv"]
    q, k, v = jnp.split(qkv, 3, axis=-1)
    q = q.reshape(B, T, H, hd).transpose(0, 2, 1, 3)
    k = k.reshape(B, T, H, hd).transpose(0, 2, 1, 3)
    v = v.reshape(B, T, H, hd).transpose(0, 2, 1, 3)

    inv_freq = 1.0 / 10000.0 ** (jnp.arange(0, hd, 2, dtype=jnp.float32) / hd)
    t = jnp.arange(T, dtype=jnp.float32)
    freqs = t[:, None] * inv_freq[None, :]
    emb = jnp.concatenate([jnp.sin(freqs), jnp.cos(freqs)], axis=-1)

    def rot(u):
        u1, u2 = u[..., ::2], u[..., 1::2]
        s, c = emb[..., ::2], emb[..., 1::2]
        return jnp.concatenate([u1 * c - u2 * s, u1 * s + u2 * c], axis=-1)

    q, k = rot(q), rot(k)
    aw = (q @ jnp.swapaxes(k, -1, -2)) / math.sqrt(hd)
    a = jax.nn.softmax(aw, axis=-1)
    attn = (a @ v).transpose(0, 2, 1, 3).reshape(B, T, C)
    x = x + attn @ params["wo"].T + params["bo"]

    xn = rmsnorm(x, params["g2"])
    h = xn @ params["w1"].T + params["b1"]
    hidden = h.shape[-1] // 2
    proj, gate = h[..., :hidden], h[..., hidden:]
    x = x + ((gate * jax.nn.sigmoid(gate)) * proj) @ params["w2"].T + params["b2"]
    return x


# ----------------------------------------------------------------------------- demo
if __name__ == "__main__":
    batch, seq, dim, n_heads, hidden = 2, 32, 128, 4, 128  # lane-dense small shapes

    key = jax.random.PRNGKey(0)
    keys = jax.random.split(key, 12)

    def u(k, shape, fan_in):
        b = 1.0 / math.sqrt(fan_in)
        return jax.random.uniform(k, shape, jnp.float32, -b, b)

    params = dict(
        g1=jax.random.uniform(keys[9], (dim,), jnp.float32, 0.9, 1.1),
        wqkv=u(keys[0], (3 * dim, dim), dim),
        bqkv=u(keys[1], (3 * dim,), dim),
        wo=u(keys[2], (dim, dim), dim),
        bo=u(keys[3], (dim,), dim),
        g2=jax.random.uniform(keys[10], (dim,), jnp.float32, 0.9, 1.1),
        w1=u(keys[4], (2 * hidden, dim), dim),
        b1=u(keys[5], (2 * hidden,), dim),
        w2=u(keys[6], (dim, hidden), hidden),
        b2=u(keys[7], (dim,), hidden),
    )

    x = jax.random.normal(keys[8], (batch, seq, dim), jnp.float32)

    # f32 path: checked against the plain-JAX reference.
    out = transformer_block_pallas(x, params, n_heads=n_heads)
    out = jax.block_until_ready(out)
    ref = transformer_block_ref(x, params, n_heads=n_heads)

    assert out.shape == (batch, seq, dim)
    max_err = float(jnp.max(jnp.abs(out - ref)))
    assert jnp.allclose(out, ref, atol=3e-3, rtol=3e-3), \
        f"mismatch vs reference: max abs err {max_err}"

    # bf16 storage path (MXU-native, per the perf review); sanity check only.
    out_bf16 = transformer_block_pallas(x, params, n_heads=n_heads,
                                        compute_dtype=jnp.bfloat16)
    out_bf16 = jax.block_until_ready(out_bf16)
    assert bool(jnp.isfinite(out_bf16.astype(jnp.float32)).all())

    print("KERNEL_OK")
</pallas_src>

<mosaic_0001>
module attributes {stable_mosaic.version = 11 : i64} {
  func.func @_norm_qkv_kernel(%arg0: i32, %arg1: i32, %arg2: i32, %arg3: memref<64x128xf32, #tpu.memory_space<vmem>>, %arg4: memref<1x128xf32, #tpu.memory_space<vmem>>, %arg5: memref<1x128x128xf32, #tpu.memory_space<vmem>>, %arg6: memref<1x1x128xf32, #tpu.memory_space<vmem>>, %arg7: memref<1x64x128xf32, #tpu.memory_space<vmem>>) attributes {dimension_semantics = [#tpu.dimension_semantics<parallel>, #tpu.dimension_semantics<arbitrary>, #tpu.dimension_semantics<arbitrary>], iteration_bounds = array<i64: 1, 3, 1>, scalar_prefetch = 0 : i64, scratch_operands = 0 : i64, tpu.core_type = #tpu.core_type<tc>, window_params = [{transform_indices = @transform_0, window_bounds = array<i64: 64, 128>}, {pipeline_mode = #tpu.pipeline_mode<synchronous>, transform_indices = @transform_1, window_bounds = array<i64: 1, 128>}, {transform_indices = @transform_2, window_bounds = array<i64: 1, 128, 128>}, {transform_indices = @transform_3, window_bounds = array<i64: 1, 1, 128>}, {transform_indices = @transform_4, window_bounds = array<i64: 1, 64, 128>}]} {
    %c0 = arith.constant 0 : index
    %c0_0 = arith.constant 0 : index
    %0 = vector.load %arg3[%c0, %c0_0] : memref<64x128xf32, #tpu.memory_space<vmem>>, vector<64x128xf32>
    %c0_1 = arith.constant 0 : index
    %c0_2 = arith.constant 0 : index
    %1 = vector.load %arg4[%c0_1, %c0_2] : memref<1x128xf32, #tpu.memory_space<vmem>>, vector<1x128xf32>
    %2 = arith.mulf %0, %0 : vector<64x128xf32>
    %cst = arith.constant dense<0.000000e+00> : vector<64xf32>
    %3 = vector.multi_reduction <add>, %2, %cst [1] : vector<64x128xf32> to vector<64xf32>
    %4 = vector.shape_cast %3 : vector<64xf32> to vector<64x1xf32>
    %5 = math.sqrt %4 : vector<64x1xf32>
    %6 = vector.broadcast %1 : vector<1x128xf32> to vector<64x128xf32>
    %7 = arith.mulf %6, %0 : vector<64x128xf32>
    %cst_3 = arith.constant 9.99999997E-7 : f32
    %8 = vector.broadcast %cst_3 : f32 to vector<64x1xf32>
    %9 = arith.addf %5, %8 : vector<64x1xf32>
    %10 = vector.broadcast %9 : vector<64x1xf32> to vector<64x128xf32>
    %11 = arith.divf %7, %10 : vector<64x128xf32>
    %c0_4 = arith.constant 0 : index
    %c0_5 = arith.constant 0 : index
    %c0_6 = arith.constant 0 : index
    %12 = vector.load %arg5[%c0_4, %c0_5, %c0_6] : memref<1x128x128xf32, #tpu.memory_space<vmem>>, vector<1x128x128xf32>
    %13 = vector.shape_cast %12 : vector<1x128x128xf32> to vector<128x128xf32>
    %cst_7 = arith.constant dense<0.000000e+00> : vector<64x128xf32>
    %14 = tpu.matmul %11, %13, %cst_7 {dimension_numbers = #tpu.dot_dimension_numbers<[1], [0], [0], [1], [0, 0, 1, 1], [], []>} : vector<64x128xf32>, vector<128x128xf32>, vector<64x128xf32> -> vector<64x128xf32>
    %c0_8 = arith.constant 0 : index
    %c0_9 = arith.constant 0 : index
    %c0_10 = arith.constant 0 : index
    %15 = vector.load %arg6[%c0_8, %c0_9, %c0_10] : memref<1x1x128xf32, #tpu.memory_space<vmem>>, vector<1x1x128xf32>
    %16 = vector.shape_cast %15 : vector<1x1x128xf32> to vector<1x128xf32>
    %17 = vector.broadcast %16 : vector<1x128xf32> to vector<64x128xf32>
    %18 = arith.addf %14, %17 : vector<64x128xf32>
    %c0_11 = arith.constant 0 : index
    %c0_12 = arith.constant 0 : index
    %c0_13 = arith.constant 0 : index
    %19 = vector.load %arg7[%c0_11, %c0_12, %c0_13] : memref<1x64x128xf32, #tpu.memory_space<vmem>>, vector<1x64x128xf32>
    %20 = vector.shape_cast %19 : vector<1x64x128xf32> to vector<64x128xf32>
    %21 = vector.shape_cast %18 : vector<64x128xf32> to vector<1x64x128xf32>
    tpu.vector_store %arg7[%c0_11, %c0_12, %c0_13], %21 {strides = array<i32>} : memref<1x64x128xf32, #tpu.memory_space<vmem>>, vector<1x64x128xf32>,
    return
  }
  func.func @transform_0(%arg0: i32, %arg1: i32, %arg2: i32) -> (i32, i32) {
    %c0_i32 = arith.constant 0 : i32
    %c0_i32_0 = arith.constant 0 : i32
    return %arg0, %c0_i32 : i32, i32
  }
  func.func @transform_1(%arg0: i32, %arg1: i32, %arg2: i32) -> (i32, i32) {
    %c0_i32 = arith.constant 0 : i32
    %c0_i32_0 = arith.constant 0 : i32
    %c0_i32_1 = arith.constant 0 : i32
    return %c0_i32, %c0_i32_0 : i32, i32
  }
  func.func @transform_2(%arg0: i32, %arg1: i32, %arg2: i32) -> (i32, i32, i32) {
    %c0_i32 = arith.constant 0 : i32
    %c0_i32_0 = arith.constant 0 : i32
    return %arg1, %c0_i32, %arg2 : i32, i32, i32
  }
  func.func @transform_3(%arg0: i32, %arg1: i32, %arg2: i32) -> (i32, i32, i32) {
    %c0_i32 = arith.constant 0 : i32
    %c0_i32_0 = arith.constant 0 : i32
    return %arg1, %c0_i32, %arg2 : i32, i32, i32
  }
  func.func @transform_4(%arg0: i32, %arg1: i32, %arg2: i32) -> (i32, i32, i32) {
    %c0_i32 = arith.constant 0 : i32
    return %arg1, %arg0, %arg2 : i32, i32, i32
  }
}

</mosaic_0001>

<llo_original>
// kernel: tpu_custom_call.1
$region0: #{tpu_custom_call.1}
  #allocation0 [shape = 'u32[]', space=smem, size = 0x4, offset = 0x4, fixed_abs, tag = 'smem constant byte address 0x4 - core index']
  #allocation1 [shape = 'u32[144,128]{1,0:T(1,128)}', space=vmem, size = 0x12000, scoped, tag = 'internal scratch']
  %s0 = inlined_call_operand.hbm [shape: f32[64,128], index: 0, kind: input, shape index: {}]
  %s1 = inlined_call_operand.hbm [shape: f32[1,128], index: 1, kind: input, shape index: {}]
  %s2 = inlined_call_operand.hbm [shape: f32[3,128,128], index: 2, kind: input, shape index: {}]
  %s3 = inlined_call_operand.hbm [shape: f32[3,1,128], index: 3, kind: input, shape index: {}]
  %s4 = inlined_call_operand.hbm [shape: f32[3,64,128], index: 4, kind: output, shape index: {}]
  %s5 = sld [smem:[#allocation0]]
  $region65: #{tpu_custom_call.1} parent=0
    _
  %s7 = ssub.s32 1, %s5
  %s8 = scalar_select 0, %s7, %s5
  $region1: #{tpu_custom_call.1} parent=0
    #allocation2 [shape = 'u8[32768]{0}', space=vmem, size = 0x8000, scoped, tag = 'input window, operand 0, single buffered']
    #allocation3 [shape = 's32[2]{0}', space=sflag, size = 0x8, scoped, tag = 'scoped memory for tpu_custom_call.1']
    #allocation4 [shape = 's32[2]{0}', space=sflag, size = 0x8, scoped, tag = 'scoped memory for tpu_custom_call.1']
    #allocation5 [shape = 'u8[512]{0}', space=vmem, size = 0x400, scoped, tag = 'input window, operand 1, single buffered']
    #allocation6 [shape = 's32[1]{0}', space=sflag, size = 0x4, scoped, tag = 'scoped memory for tpu_custom_call.1']
    #allocation7 [shape = 'u8[131072]{0}', space=vmem, size = 0x20000, scoped, tag = 'input window, operand 2']
    #allocation8 [shape = 'u8[1024]{0}', space=vmem, size = 0x400, scoped, tag = 'input window, operand 3']
    #allocation9 [shape = 'u8[65536]{0}', space=vmem, size = 0x10000, scoped, tag = 'output window, operand 0']
    %9 = vsyncpa [#allocation3], 0
    %10 = vsyncpa [#allocation6], 0
    %11 = vsyncpa [#allocation4], 0
    %s12 = scalar_lea.sflag [#allocation4], 1
    %13 = vsyncpa %s12, 0
    loop: start=0, step=1, limit=5
    $region2: #{tpu_custom_call.1} parent=1 // loop_pre_header
      _
    $region3: #{tpu_custom_call.1} parent=1 // loop_header
      %s15 = sphi 0, %s19
      %p16 = scmp.ge.s32.totalorder %s15, 5
      %s22 = sphi 0, %s41
      %s23 = sphi 0, %s37
      %s24 = sphi 0, %s33
      %s25 = sphi 0, %s22
      %s26 = sphi 0, %s23
      %s27 = sphi 0, %s24
      %s28 = sphi 0, %s25
      %s29 = sphi 0, %s26
      %s30 = sphi 0, %s27
      %s44 = sphi 0, %s46
      %s47 = sphi 0, %s44
      %s48 = sphi 0, %s47
      %s64 = sphi 0, %s48
      %s68 = sphi 0, %s68
      %s70 = sphi 0, %s68
      %s71 = sphi 0, %s70
      %s85 = sphi 0, %s71
      %s93 = sphi 0, %s95
      %s96 = sphi 0, %s93
      %s97 = sphi 0, %s96
      %s113 = sphi 0, %s97
      %s121 = sphi 0, %s123
      %s124 = sphi 0, %s121
      %s125 = sphi 0, %s124
      %s141 = sphi 0, %s125
      %s151 = sphi 0, %s153
      %s154 = sphi 0, %s151
      %s155 = sphi 0, %s154
      %s171 = sphi 0, %s155
    $region4: #{tpu_custom_call.1} parent=1 // loop_header_branch
      %18 = sbr.rel (%p16) target = $region8
    $region5: #{tpu_custom_call.1} parent=1 // loop_body
      %s20 = ssub.s32 %s15, 1
      %s21 = ssub.s32 %s15, 2
      %s31 = sadd.s32 1, %s24
      %p32 = scmp.ge.s32.totalorder %s31, 1
      %s33 = scalar_select %p32, 0, %s31
      %s34 = sadd.s32 1, %s23
      %s35 = scalar_select %p32, %s34, %s23
      %p36 = scmp.ge.s32.totalorder %s35, 3
      %s37 = scalar_select %p36, 0, %s35
      %s38 = sadd.s32 1, %s22
      %s39 = scalar_select %p36, %s38, %s22
      %p40 = scmp.ge.s32.totalorder %s39, 1
      %s41 = scalar_select %p40, 0, %s39
      %s42 = ssub.s32 %s22, %s41
      %p43 = scmp.eq.s32.totalorder %s42, 0
      %s45 = sadd.s32 %s44, 1
      %s46 = scalar_select %p43, %s44, %s45
      %p49 = pneg %p43
      %p50 = scmp.eq.s32.totalorder %s15, 2
      %p51 = por %p49, %p50
      %p52 = scmp.ne.s32.totalorder %s44, %s47
      %p53 = scmp.eq.s32.totalorder %s15, 0
      %p54 = por %p52, %p53
      %p55 = scmp.ne.s32.totalorder %s44, %s47
      %p56 = scmp.eq.s32.totalorder %s20, 2
      %p57 = por %p55, %p56
      %p58 = scmp.ne.s32.totalorder %s47, %s48
      %p59 = scmp.eq.s32.totalorder %s20, 0
      %p60 = por %p58, %p59
      %p61 = scmp.ne.s32.totalorder %s47, %s48
      %p62 = scmp.eq.s32.totalorder %s21, 2
      %p63 = por %p61, %p62
      %p65 = scmp.ne.s32.totalorder %s48, %s64
      %p66 = scmp.eq.s32.totalorder %s21, 0
      %p67 = por %p65, %p66
      %s69 = sadd.s32 %s68, 1
      %p72 = scmp.eq.s32.totalorder %s15, 2
      %p73 = scmp.ne.s32.totalorder %s68, %s70
      %p74 = scmp.eq.s32.totalorder %s15, 0
      %p75 = por %p73, %p74
      %p76 = scmp.ne.s32.totalorder %s68, %s70
      %p77 = scmp.eq.s32.totalorder %s20, 2
      %p78 = por %p76, %p77
      %p79 = scmp.ne.s32.totalorder %s70, %s71
      %p80 = scmp.eq.s32.totalorder %s20, 0
      %p81 = por %p79, %p80
      %p82 = scmp.ne.s32.totalorder %s70, %s71
      %p83 = scmp.eq.s32.totalorder %s21, 2
      %p84 = por %p82, %p83
      %p86 = scmp.ne.s32.totalorder %s71, %s85
      %p87 = scmp.eq.s32.totalorder %s21, 0
      %p88 = por %p86, %p87
      %s89 = ssub.s32 %s23, %s37
      %s90 = ssub.s32 %s24, %s33
      %s91 = sor.u32 %s89, %s90
      %p92 = scmp.eq.s32.totalorder %s91, 0
      %s94 = sadd.s32 %s93, 1
      %s95 = scalar_select %p92, %s93, %s94
      %p98 = pneg %p92
      %p99 = scmp.eq.s32.totalorder %s15, 2
      %p100 = por %p98, %p99
      %p101 = scmp.ne.s32.totalorder %s93, %s96
      %p102 = scmp.eq.s32.totalorder %s15, 0
      %p103 = por %p101, %p102
      %p104 = scmp.ne.s32.totalorder %s93, %s96
      %p105 = scmp.eq.s32.totalorder %s20, 2
      %p106 = por %p104, %p105
      %p107 = scmp.ne.s32.totalorder %s96, %s97
      %p108 = scmp.eq.s32.totalorder %s20, 0
      %p109 = por %p107, %p108
      %p110 = scmp.ne.s32.totalorder %s96, %s97
      %p111 = scmp.eq.s32.totalorder %s21, 2
      %p112 = por %p110, %p111
      %p114 = scmp.ne.s32.totalorder %s97, %s113
      %p115 = scmp.eq.s32.totalorder %s21, 0
      %p116 = por %p114, %p115
      %s117 = ssub.s32 %s23, %s37
      %s118 = ssub.s32 %s24, %s33
      %s119 = sor.u32 %s117, %s118
      %p120 = scmp.eq.s32.totalorder %s119, 0
      %s122 = sadd.s32 %s121, 1
      %s123 = scalar_select %p120, %s121, %s122
      %p126 = pneg %p120
      %p127 = scmp.eq.s32.totalorder %s15, 2
      %p128 = por %p126, %p127
      %p129 = scmp.ne.s32.totalorder %s121, %s124
      %p130 = scmp.eq.s32.totalorder %s15, 0
      %p131 = por %p129, %p130
      %p132 = scmp.ne.s32.totalorder %s121, %s124
      %p133 = scmp.eq.s32.totalorder %s20, 2
      %p134 = por %p132, %p133
      %p135 = scmp.ne.s32.totalorder %s124, %s125
      %p136 = scmp.eq.s32.totalorder %s20, 0
      %p137 = por %p135, %p136
      %p138 = scmp.ne.s32.totalorder %s124, %s125
      %p139 = scmp.eq.s32.totalorder %s21, 2
      %p140 = por %p138, %p139
      %p142 = scmp.ne.s32.totalorder %s125, %s141
      %p143 = scmp.eq.s32.totalorder %s21, 0
      %p144 = por %p142, %p143
      %s145 = ssub.s32 %s23, %s37
      %s146 = ssub.s32 %s22, %s41
      %s147 = sor.u32 %s145, %s146
      %s148 = ssub.s32 %s24, %s33
      %s149 = sor.u32 %s147, %s148
      %p150 = scmp.eq.s32.totalorder %s149, 0
      %s152 = sadd.s32 %s151, 1
      %s153 = scalar_select %p150, %s151, %s152
      %p156 = pneg %p150
      %p157 = scmp.eq.s32.totalorder %s15, 2
      %p158 = por %p156, %p157
      %p159 = scmp.ne.s32.totalorder %s151, %s154
      %p160 = scmp.eq.s32.totalorder %s15, 0
      %p161 = por %p159, %p160
      %p162 = scmp.ne.s32.totalorder %s151, %s154
      %p163 = scmp.eq.s32.totalorder %s20, 2
      %p164 = por %p162, %p163
      %p165 = scmp.ne.s32.totalorder %s154, %s155
      %p166 = scmp.eq.s32.totalorder %s20, 0
      %p167 = por %p165, %p166
      %p168 = scmp.ne.s32.totalorder %s154, %s155
      %p169 = scmp.eq.s32.totalorder %s21, 2
      %p170 = por %p168, %p169
      %p172 = scmp.ne.s32.totalorder %s155, %s171
      %p173 = scmp.eq.s32.totalorder %s21, 0
      %p174 = por %p172, %p173
      %p175 = scmp.le.s32.totalorder 1, %s15
      %p176 = scmp.lt.s32.totalorder %s15, 4
      %p177 = pnand %p175, %p176
      %p178 = pneg %p177
      // Predicated region
      $region9: #{tpu_custom_call.1} parent=5 // pred_check
        _
      $region10: #{tpu_custom_call.1} parent=5 // pred_check_branch
        %180 = sbr.rel (%p177) target = $region12
      $region11: #{tpu_custom_call.1} parent=5 // pred_region
        %s181 = ssub.s32 %s15, 1
        // Predicated region
        $region13: #{tpu_custom_call.1} parent=11 // pred_check
          %p182 = pneg %p60
        $region14: #{tpu_custom_call.1} parent=11 // pred_check_branch
          %184 = sbr.rel (%p182) target = $region16
        $region15: #{tpu_custom_call.1} parent=11 // pred_region
          %s185 = smul.u32 8, %s25
          %s187 = ssub.s32 1024, 1024
          %188 = vsyncadd [#allocation3], %s187
          %s189 = smul.addr %s185, 128
          %s190 = scalar_lea.hbm %s0, %s189
          %s191 = sshll.u32 [#allocation2], 4
          %s192 = int_to_ptr.vmem [resolvable:$true] %s191
          %197 = dma.hbm_to_vmem [thread:$0]  %s190, 1024, %s192, [#allocation3], 128, 128, 8
        $region16: #{tpu_custom_call.1} parent=11 // pred_fallthru
          _
        // Predicated region
        $region17: #{tpu_custom_call.1} parent=11 // pred_check
          %p198 = pneg %p81
        $region18: #{tpu_custom_call.1} parent=11 // pred_check_branch
          %200 = sbr.rel (%p198) target = $region20
        $region19: #{tpu_custom_call.1} parent=11 // pred_region
          %s202 = ssub.s32 16, 16
          %203 = vsyncadd [#allocation6], %s202
          %s205 = sshll.u32 [#allocation5], 4
          %s206 = int_to_ptr.vmem [resolvable:$true] %s205
          %208 = dma.hbm_to_vmem [thread:$0]  %s1, 16, %s206, [#allocation6]
        $region20: #{tpu_custom_call.1} parent=11 // pred_fallthru
          _
      $region12: #{tpu_custom_call.1} parent=5 // pred_fallthru
        _
      %p209 = scmp.lt.s32.totalorder %s15, 3
      // Predicated region
      $region21: #{tpu_custom_call.1} parent=5 // pred_check
        %p210 = pneg %p209
      $region22: #{tpu_custom_call.1} parent=5 // pred_check_branch
        %212 = sbr.rel (%p210) target = $region24
      $region23: #{tpu_custom_call.1} parent=5 // pred_region
        // Predicated region
        $region25: #{tpu_custom_call.1} parent=23 // pred_check
          %p213 = pneg %p103
        $region26: #{tpu_custom_call.1} parent=23 // pred_check_branch
          %215 = sbr.rel (%p213) target = $region28
        $region27: #{tpu_custom_call.1} parent=23 // pred_region
          %s216 = sand.u32 %s15, 1
          %s217 = scalar_lea.sflag [#allocation3], %s216
          %s218 = sand.u32 %s93, 1
          %s219 = smul.addr %s218, 128
          %s220 = scalar_lea.vmem [#allocation7], %s219
          %s222 = ssub.s32 2048, 2048
          %223 = vsyncadd %s217, %s222
          %s224 = smul.addr %s23, 16
          %s225 = sadd.s32 %s24, %s224
          %s226 = smul.addr %s225, 128
          %s227 = scalar_lea.hbm %s2, %s226
          %s228 = sshll.u32 %s220, 4
          %s229 = int_to_ptr.vmem [resolvable:$true] %s228
          %234 = dma.hbm_to_vmem [thread:$0]  %s227, 2048, %s229, %s217, 128, 128, 8
        $region28: #{tpu_custom_call.1} parent=23 // pred_fallthru
          _
        // Predicated region
        $region29: #{tpu_custom_call.1} parent=23 // pred_check
          %p235 = pneg %p131
        $region30: #{tpu_custom_call.1} parent=23 // pred_check_branch
          %237 = sbr.rel (%p235) target = $region32
        $region31: #{tpu_custom_call.1} parent=23 // pred_region
          %s238 = sand.u32 %s15, 1
          %s239 = scalar_lea.sflag [#allocation3], %s238
          %s240 = sand.u32 %s121, 1
          %s241 = scalar_lea.vmem [#allocation8], %s240
          %s243 = ssub.s32 16, 16
          %244 = vsyncadd %s239, %s243
          %s245 = sadd.s32 %s24, %s23
          %s246 = smul.addr %s245, 16
          %s247 = scalar_lea.hbm %s3, %s246
          %s249 = sshll.u32 %s241, 4
          %s250 = int_to_ptr.vmem [resolvable:$true] %s249
          %252 = dma.hbm_to_vmem [thread:$0]  %s247, 16, %s250, %s239
        $region32: #{tpu_custom_call.1} parent=23 // pred_fallthru
          _
      $region24: #{tpu_custom_call.1} parent=5 // pred_fallthru
        _
      %p253 = scmp.le.s32.totalorder 1, %s15
      %p254 = scmp.lt.s32.totalorder %s15, 4
      %p255 = pnand %p253, %p254
      %p256 = pneg %p255
      // Predicated region
      $region33: #{tpu_custom_call.1} parent=5 // pred_check
        _
      $region34: #{tpu_custom_call.1} parent=5 // pred_check_branch
        %258 = sbr.rel (%p255) target = $region36
      $region35: #{tpu_custom_call.1} parent=5 // pred_region
        %s259 = ssub.s32 %s15, 1
        // Predicated region
        $region37: #{tpu_custom_call.1} parent=35 // pred_check
          %p260 = pneg %p60
        $region38: #{tpu_custom_call.1} parent=35 // pred_check_branch
          %262 = sbr.rel (%p260) target = $region40
        $region39: #{tpu_custom_call.1} parent=35 // pred_region
          %263 = dma.done [#allocation3], 1024
        $region40: #{tpu_custom_call.1} parent=35 // pred_fallthru
          _
        // Predicated region
        $region41: #{tpu_custom_call.1} parent=35 // pred_check
          %p264 = pneg %p81
        $region42: #{tpu_custom_call.1} parent=35 // pred_check_branch
          %266 = sbr.rel (%p264) target = $region44
        $region43: #{tpu_custom_call.1} parent=35 // pred_region
          %267 = dma.done [#allocation6], 16
        $region44: #{tpu_custom_call.1} parent=35 // pred_fallthru
          _
        %s268 = sand.u32 %s20, 1
        %s269 = scalar_lea.sflag [#allocation3], %s268
        %s270 = sand.u32 %s96, 1
        %s271 = smul.addr %s270, 128
        %s272 = scalar_lea.vmem [#allocation7], %s271
        // Predicated region
        $region45: #{tpu_custom_call.1} parent=35 // pred_check
          %p273 = pneg %p109
        $region46: #{tpu_custom_call.1} parent=35 // pred_check_branch
          %275 = sbr.rel (%p273) target = $region48
        $region47: #{tpu_custom_call.1} parent=35 // pred_region
          %276 = dma.done %s269, 2048
        $region48: #{tpu_custom_call.1} parent=35 // pred_fallthru
          _
        %s277 = sand.u32 %s20, 1
        %s278 = scalar_lea.sflag [#allocation3], %s277
        %s279 = sand.u32 %s124, 1
        %s280 = scalar_lea.vmem [#allocation8], %s279
        // Predicated region
        $region49: #{tpu_custom_call.1} parent=35 // pred_check
          %p281 = pneg %p137
        $region50: #{tpu_custom_call.1} parent=35 // pred_check_branch
          %283 = sbr.rel (%p281) target = $region52
        $region51: #{tpu_custom_call.1} parent=35 // pred_region
          %284 = dma.done %s278, 16
        $region52: #{tpu_custom_call.1} parent=35 // pred_fallthru
          _
        %p285 = pneg %p60
        %p286 = pneg %p57
        %p287 = pneg %p81
        %p288 = pneg %p78
        %s289 = sand.u32 %s20, 1
        %s290 = scalar_lea.sflag [#allocation3], %s289
        %s291 = sand.u32 %s96, 1
        %s292 = smul.addr %s291, 128
        %s293 = scalar_lea.vmem [#allocation7], %s292
        %p294 = pneg %p109
        %p295 = pneg %p106
        %s296 = sand.u32 %s20, 1
        %s297 = scalar_lea.sflag [#allocation3], %s296
        %s298 = sand.u32 %s124, 1
        %s299 = scalar_lea.vmem [#allocation8], %s298
        %p300 = pneg %p137
        %p301 = pneg %p134
        %p302 = pneg %p167
        %p303 = pneg %p164
        %s304 = sand.u32 %s154, 1
        %s305 = scalar_lea.sflag [#allocation4], %s304
        %s306 = sand.u32 %s154, 1
        %s307 = smul.addr %s306, 64
        %s308 = scalar_lea.vmem [#allocation9], %s307
        %s309 = smul.u32 8, %s25
        %s310 = smul.u32 8, %s25
        %v311 = vld [vmem:[#allocation2] sm:$0xff]
        %v312 = vld [vmem:[#allocation2 + $0x8] sm:$0xff]
        %v313 = vld [vmem:[#allocation2 + $0x10] sm:$0xff]
        %v314 = vld [vmem:[#allocation2 + $0x18] sm:$0xff]
        %v315 = vld [vmem:[#allocation2 + $0x20] sm:$0xff]
        %v316 = vld [vmem:[#allocation2 + $0x28] sm:$0xff]
        %v317 = vld [vmem:[#allocation2 + $0x30] sm:$0xff]
        %v318 = vld [vmem:[#allocation2 + $0x38] sm:$0xff]
        %v319 = vld [vmem:[#allocation5] sm:$0x1]
        %v320 = vmul.f32 %v311, %v311
        %v321 = vmul.f32 %v312, %v312
        %v322 = vmul.f32 %v313, %v313
        %v323 = vmul.f32 %v314, %v314
        %v324 = vmul.f32 %v315, %v315
        %v325 = vmul.f32 %v316, %v316
        %v326 = vmul.f32 %v317, %v317
        %v327 = vmul.f32 %v318, %v318
        %328 = vadd.xlane.f32.xlu0 %v320
        %v329 = vpop.xlane.xlu0 %328
        %330 = vadd.xlane.f32.xlu0 %v321
        %v331 = vpop.xlane.xlu0 %330
        %332 = vadd.xlane.f32.xlu0 %v322
        %v333 = vpop.xlane.xlu0 %332
        %334 = vadd.xlane.f32.xlu0 %v323
        %v335 = vpop.xlane.xlu0 %334
        %336 = vadd.xlane.f32.xlu0 %v324
        %v337 = vpop.xlane.xlu0 %336
        %338 = vadd.xlane.f32.xlu0 %v325
        %v339 = vpop.xlane.xlu0 %338
        %340 = vadd.xlane.f32.xlu0 %v326
        %v341 = vpop.xlane.xlu0 %340
        %342 = vadd.xlane.f32.xlu0 %v327
        %v343 = vpop.xlane.xlu0 %342
        %v344 = vrsqrt.pop %v329
        %v345 = vmul.f32 %v329, %v344
        %vm346 = vcmp.eq.f32.partialorder %v329, inf
        %v347 = vsel %vm346, %v329, %v345
        %vm348 = vcmp.eq.f32.partialorder %v329, 0.0
        %v349 = vand.u32 %v329, 2147483648
        %v350 = vsel %vm348, %v349, %v347
        %v351 = vrsqrt.pop %v331
        %v352 = vmul.f32 %v331, %v351
        %vm353 = vcmp.eq.f32.partialorder %v331, inf
        %v354 = vsel %vm353, %v331, %v352
        %vm355 = vcmp.eq.f32.partialorder %v331, 0.0
        %v356 = vand.u32 %v331, 2147483648
        %v357 = vsel %vm355, %v356, %v354
        %v358 = vrsqrt.pop %v333
        %v359 = vmul.f32 %v333, %v358
        %vm360 = vcmp.eq.f32.partialorder %v333, inf
        %v361 = vsel %vm360, %v333, %v359
        %vm362 = vcmp.eq.f32.partialorder %v333, 0.0
        %v363 = vand.u32 %v333, 2147483648
        %v364 = vsel %vm362, %v363, %v361
        %v365 = vrsqrt.pop %v335
        %v366 = vmul.f32 %v335, %v365
        %vm367 = vcmp.eq.f32.partialorder %v335, inf
        %v368 = vsel %vm367, %v335, %v366
        %vm369 = vcmp.eq.f32.partialorder %v335, 0.0
        %v370 = vand.u32 %v335, 2147483648
        %v371 = vsel %vm369, %v370, %v368
        %v372 = vrsqrt.pop %v337
        %v373 = vmul.f32 %v337, %v372
        %vm374 = vcmp.eq.f32.partialorder %v337, inf
        %v375 = vsel %vm374, %v337, %v373
        %vm376 = vcmp.eq.f32.partialorder %v337, 0.0
        %v377 = vand.u32 %v337, 2147483648
        %v378 = vsel %vm376, %v377, %v375
        %v379 = vrsqrt.pop %v339
        %v380 = vmul.f32 %v339, %v379
        %vm381 = vcmp.eq.f32.partialorder %v339, inf
        %v382 = vsel %vm381, %v339, %v380
        %vm383 = vcmp.eq.f32.partialorder %v339, 0.0
        %v384 = vand.u32 %v339, 2147483648
        %v385 = vsel %vm383, %v384, %v382
        %v386 = vrsqrt.pop %v341
        %v387 = vmul.f32 %v341, %v386
        %vm388 = vcmp.eq.f32.partialorder %v341, inf
        %v389 = vsel %vm388, %v341, %v387
        %vm390 = vcmp.eq.f32.partialorder %v341, 0.0
        %v391 = vand.u32 %v341, 2147483648
        %v392 = vsel %vm390, %v391, %v389
        %v393 = vrsqrt.pop %v343
        %v394 = vmul.f32 %v343, %v393
        %vm395 = vcmp.eq.f32.partialorder %v343, inf
        %v396 = vsel %vm395, %v343, %v394
        %vm397 = vcmp.eq.f32.partialorder %v343, 0.0
        %v398 = vand.u32 %v343, 2147483648
        %v399 = vsel %vm397, %v398, %v396
        %v401 = vlaneseq
        %v402 = vshrl.u32 %v401, 7
        %v403 = vsub.s32 0, %v402
        %v404 = vrot.slane %v319, %v403
        %v406 = vmul.f32 %v404, %v311
        %v407 = vmul.f32 %v404, %v312
        %v408 = vmul.f32 %v404, %v313
        %v409 = vmul.f32 %v404, %v314
        %v410 = vmul.f32 %v404, %v315
        %v411 = vmul.f32 %v404, %v316
        %v412 = vmul.f32 %v404, %v317
        %v413 = vmul.f32 %v404, %v318
        %v414 = vadd.f32 %v350, 1e-06
        %v415 = vadd.f32 %v357, 1e-06
        %v416 = vadd.f32 %v364, 1e-06
        %v417 = vadd.f32 %v371, 1e-06
        %v418 = vadd.f32 %v378, 1e-06
        %v419 = vadd.f32 %v385, 1e-06
        %v420 = vadd.f32 %v392, 1e-06
        %v421 = vadd.f32 %v399, 1e-06
        %v422 = vrcp.pop %v414
        %v423 = vmul.f32 %v406, %v422
        %v424 = vrcp.pop %v415
        %v425 = vmul.f32 %v407, %v424
        %v426 = vrcp.pop %v416
        %v427 = vmul.f32 %v408, %v426
        %v428 = vrcp.pop %v417
        %v429 = vmul.f32 %v409, %v428
        %v430 = vrcp.pop %v418
        %v431 = vmul.f32 %v410, %v430
        %v432 = vrcp.pop %v419
        %v433 = vmul.f32 %v411, %v432
        %v434 = vrcp.pop %v420
        %v435 = vmul.f32 %v412, %v434
        %v436 = vrcp.pop %v421
        %v437 = vmul.f32 %v413, %v436
        %v438 = vld [vmem:[%s272] sm:$0xff]
        %v439 = vld [vmem:[%s272 + $0x8] sm:$0xff]
        %v440 = vld [vmem:[%s272 + $0x10] sm:$0xff]
        %v441 = vld [vmem:[%s272 + $0x18] sm:$0xff]
        %v442 = vld [vmem:[%s272 + $0x20] sm:$0xff]
        %v443 = vld [vmem:[%s272 + $0x28] sm:$0xff]
        %v444 = vld [vmem:[%s272 + $0x30] sm:$0xff]
        %v445 = vld [vmem:[%s272 + $0x38] sm:$0xff]
        %v446 = vld [vmem:[%s272 + $0x40] sm:$0xff]
        %v447 = vld [vmem:[%s272 + $0x48] sm:$0xff]
        %v448 = vld [vmem:[%s272 + $0x50] sm:$0xff]
        %v449 = vld [vmem:[%s272 + $0x58] sm:$0xff]
        %v450 = vld [vmem:[%s272 + $0x60] sm:$0xff]
        %v451 = vld [vmem:[%s272 + $0x68] sm:$0xff]
        %v452 = vld [vmem:[%s272 + $0x70] sm:$0xff]
        %v453 = vld [vmem:[%s272 + $0x78] sm:$0xff]
        %v454 = vld [vmem:[%s280] sm:$0x1]
        %v456 = vlaneseq
        %v457 = vshrl.u32 %v456, 7
        %v458 = vsub.s32 0, %v457
        %v459 = vrot.slane %v454, %v458
        %461 = vmatprep.subr.mxu0 0.0
        %462 = vmatpush1.msra.mxu0 %v438
        %463 = vmatprep.subr.mxu0 0.0
        %464 = vmatpush1.msra.mxu0 %v439
        %465 = vmatprep.subr.mxu0 0.0
        %466 = vmatpush1.msra.mxu0 %v440
        %467 = vmatprep.subr.mxu0 0.0
        %468 = vmatpush1.msra.mxu0 %v441
        %469 = vmatprep.subr.mxu0 0.0
        %470 = vmatpush1.msra.mxu0 %v442
        %471 = vmatprep.subr.mxu0 0.0
        %472 = vmatpush1.msra.mxu0 %v443
        %473 = vmatprep.subr.mxu0 0.0
        %474 = vmatpush1.msra.mxu0 %v444
        %475 = vmatprep.subr.mxu0 0.0
        %476 = vmatpush1.msra.mxu0 %v445
        %477 = vmatprep.subr.mxu0 0.0
        %478 = vmatpush1.msra.mxu0 %v446
        %479 = vmatprep.subr.mxu0 0.0
        %480 = vmatpush1.msra.mxu0 %v447
        %481 = vmatprep.subr.mxu0 0.0
        %482 = vmatpush1.msra.mxu0 %v448
        %483 = vmatprep.subr.mxu0 0.0
        %484 = vmatpush1.msra.mxu0 %v449
        %485 = vmatprep.subr.mxu0 0.0
        %486 = vmatpush1.msra.mxu0 %v450
        %487 = vmatprep.subr.mxu0 0.0
        %488 = vmatpush1.msra.mxu0 %v451
        %489 = vmatprep.subr.mxu0 0.0
        %490 = vmatpush1.msra.mxu0 %v452
        %491 = vmatprep.subr.mxu0 0.0
        %492 = vmatpush1.msra.mxu0 %v453
        %493 = vmatprep.subr.mxu0 0.0
        %494 = vmatpush1.msra.mxu0 0.0
        %495 = vmatprep.subr.mxu0 0.0
        %496 = vmatpush1.msra.mxu0 0.0
        %497 = vmatprep.subr.mxu0 0.0
        %498 = vmatpush1.msra.mxu0 0.0
        %499 = vmatprep.subr.mxu0 0.0
        %500 = vmatpush1.msra.mxu0 0.0
        %501 = vmatprep.subr.mxu0 0.0
        %502 = vmatpush1.msra.mxu0 0.0
        %503 = vmatprep.subr.mxu0 0.0
        %504 = vmatpush1.msra.mxu0 0.0
        %505 = vmatprep.subr.mxu0 0.0
        %506 = vmatpush1.msra.mxu0 0.0
        %507 = vmatprep.subr.mxu0 0.0
        %508 = vmatpush1.msra.mxu0 0.0
        %509 = vmatprep.subr.mxu0 0.0
        %510 = vmatpush1.msra.mxu0 0.0
        %511 = vmatprep.subr.mxu0 0.0
        %512 = vmatpush1.msra.mxu0 0.0
        %513 = vmatprep.subr.mxu0 0.0
        %514 = vmatpush1.msra.mxu0 0.0
        %515 = vmatprep.subr.mxu0 0.0
        %516 = vmatpush1.msra.mxu0 0.0
        %517 = vmatprep.subr.mxu0 0.0
        %518 = vmatpush1.msra.mxu0 0.0
        %519 = vmatprep.subr.mxu0 0.0
        %520 = vmatpush1.msra.mxu0 0.0
        %521 = vmatprep.subr.mxu0 0.0
        %522 = vmatpush1.msra.mxu0 0.0
        %523 = vmatprep.subr.mxu0 0.0
        %524 = vmatpush1.msra.mxu0 0.0
        %525 = vmatprep.mubr.f32.mxu0 0.0
        %526 = vmatmul.mubr.f32.gmra.mrb[0].mxu0 %v423
        %v527 = vpop.f32.mrb[0].mxu0
        %v528 = vadd.f32 %v459, %v527
        %v529 = vpop.f32.mrb[0].mxu0
        %530 = vmatprep.mubr.f32.mxu0 0.0
        %531 = vmatmul.mubr.f32.gmra.mrb[0].mxu0 %v425
        %v532 = vpop.f32.mrb[0].mxu0
        %v533 = vadd.f32 %v459, %v532
        %v534 = vpop.f32.mrb[0].mxu0
        %535 = vmatprep.mubr.f32.mxu0 0.0
        %536 = vmatmul.mubr.f32.gmra.mrb[0].mxu0 %v427
        %v537 = vpop.f32.mrb[0].mxu0
        %v538 = vadd.f32 %v459, %v537
        %v539 = vpop.f32.mrb[0].mxu0
        %540 = vmatprep.mubr.f32.mxu0 0.0
        %541 = vmatmul.mubr.f32.gmra.mrb[0].mxu0 %v429
        %v542 = vpop.f32.mrb[0].mxu0
        %v543 = vadd.f32 %v459, %v542
        %v544 = vpop.f32.mrb[0].mxu0
        %545 = vmatprep.mubr.f32.mxu0 0.0
        %546 = vmatmul.mubr.f32.gmra.mrb[0].mxu0 %v431
        %v547 = vpop.f32.mrb[0].mxu0
        %v548 = vadd.f32 %v459, %v547
        %v549 = vpop.f32.mrb[0].mxu0
        %550 = vmatprep.mubr.f32.mxu0 0.0
        %551 = vmatmul.mubr.f32.gmra.mrb[0].mxu0 %v433
        %v552 = vpop.f32.mrb[0].mxu0
        %v553 = vadd.f32 %v459, %v552
        %v554 = vpop.f32.mrb[0].mxu0
        %555 = vmatprep.mubr.f32.mxu0 0.0
        %556 = vmatmul.mubr.f32.gmra.mrb[0].mxu0 %v435
        %v557 = vpop.f32.mrb[0].mxu0
        %v558 = vadd.f32 %v459, %v557
        %v559 = vpop.f32.mrb[0].mxu0
        %560 = vmatprep.mubr.f32.mxu0 0.0
        %561 = vmatmul.mubr.f32.gmra.mrb[0].mxu0 %v437
        %v562 = vpop.f32.mrb[0].mxu0
        %v563 = vadd.f32 %v459, %v562
        %v564 = vpop.f32.mrb[0].mxu0
        %565 = vdwg.mxu0
        %566 = vst [vmem:[%s308] sm:$0xff] %v528
        %567 = vst [vmem:[%s308 + $0x8] sm:$0xff] %v533
        %568 = vst [vmem:[%s308 + $0x10] sm:$0xff] %v538
        %569 = vst [vmem:[%s308 + $0x18] sm:$0xff] %v543
        %570 = vst [vmem:[%s308 + $0x20] sm:$0xff] %v548
        %571 = vst [vmem:[%s308 + $0x28] sm:$0xff] %v553
        %572 = vst [vmem:[%s308 + $0x30] sm:$0xff] %v558
        %573 = vst [vmem:[%s308 + $0x38] sm:$0xff] %v563
        %s574 = sand.u32 %s154, 1
        %s575 = scalar_lea.sflag [#allocation4], %s574
        %s576 = sand.u32 %s154, 1
        %s577 = smul.addr %s576, 64
        %s578 = scalar_lea.vmem [#allocation9], %s577
        // Predicated region
        $region53: #{tpu_custom_call.1} parent=35 // pred_check
          %p579 = pneg %p164
        $region54: #{tpu_custom_call.1} parent=35 // pred_check_branch
          %581 = sbr.rel (%p579) target = $region56
        $region55: #{tpu_custom_call.1} parent=35 // pred_region
          %s582 = smul.u32 8, %s25
          %s584 = ssub.s32 1024, 1024
          %585 = vsyncadd %s575, %s584
          %s586 = sadd.s32 %s27, %s582
          %s587 = smul.addr %s26, 8
          %s588 = sadd.s32 %s586, %s587
          %s589 = smul.addr %s588, 128
          %s590 = scalar_lea.hbm %s4, %s589
          %s591 = sshll.u32 %s578, 4
          %s592 = int_to_ptr.vmem [resolvable:$true] %s591
          %597 = dma.vmem_to_hbm [thread:$0]  %s592, 1024, %s590, %s575, 128, 128, 8
        $region56: #{tpu_custom_call.1} parent=35 // pred_fallthru
          _
      $region36: #{tpu_custom_call.1} parent=5 // pred_fallthru
        _
      %p598 = scmp.le.s32.totalorder 2, %s15
      // Predicated region
      $region57: #{tpu_custom_call.1} parent=5 // pred_check
        %p599 = pneg %p598
      $region58: #{tpu_custom_call.1} parent=5 // pred_check_branch
        %601 = sbr.rel (%p599) target = $region60
      $region59: #{tpu_custom_call.1} parent=5 // pred_region
        %s602 = ssub.s32 %s15, 2
        // Predicated region
        $region61: #{tpu_custom_call.1} parent=59 // pred_check
          %p603 = pneg %p170
        $region62: #{tpu_custom_call.1} parent=59 // pred_check_branch
          %605 = sbr.rel (%p603) target = $region64
        $region63: #{tpu_custom_call.1} parent=59 // pred_region
          %s606 = sand.u32 %s155, 1
          %s607 = scalar_lea.sflag [#allocation4], %s606
          %s608 = sand.u32 %s155, 1
          %s609 = smul.addr %s608, 64
          %s610 = scalar_lea.vmem [#allocation9], %s609
          %611 = dma.done %s607, 1024
        $region64: #{tpu_custom_call.1} parent=59 // pred_fallthru
          _
      $region60: #{tpu_custom_call.1} parent=5 // pred_fallthru
        _
    $region6: #{tpu_custom_call.1} parent=1 // loop_footer
      %s19 = sadd.s32 1, %s15
    $region7: #{tpu_custom_call.1} parent=1 // loop_footer_branch
      %14 = sbr.rel target = $region3
    $region8: #{tpu_custom_call.1} parent=1 // loop_exit
      _
    %612 = vsyncpa [#allocation3], 1
    %s613 = scalar_lea.sflag [#allocation3], 1
    %614 = vsyncpa %s613, 1
    %615 = vsyncpa [#allocation6], 1
    %616 = vsyncpa [#allocation4], 1
    %s617 = scalar_lea.sflag [#allocation4], 1
    %618 = vsyncpa %s617, 1

</llo_original>
